<compile_context>
chip_gen: v7x
topology: tpu7x:2x2x1
jax: 0.10.0
libtpu: 0.0.40
codegen_flags: <defaults>
</compile_context>

<pallas_src>
import jax
import jax.numpy as jnp
from jax import lax
from jax.experimental import pallas as pl
from jax.experimental.pallas import tpu as pltpu

# Deterministic "module init": loss weights for [MSE, L1].
W_MSE = 0.7
W_L1 = 0.3

_LANE = 128


def _round_up(x, m):
    return ((x + m - 1) // m) * m


def _tpu_config():
    """Generation-dependent defaults: (core_splits, tile_rows_f32, vmem_limit)."""
    core_splits = 1
    tile_rows = 8192                    # 4 MiB/block f32 -> 16 MiB pipeline bufs
    vmem_limit = 32 * 1024 * 1024       # safe on v7x (64 MiB physical)
    try:
        info = pltpu.get_tpu_info()
        vmem_cap = getattr(info, "vmem_capacity_bytes", None)
        if vmem_cap is not None and vmem_cap >= 100 * 1024 * 1024:
            # v5e/v6e: 128 MiB physical VMEM -> bigger tiles, fewer grid steps.
            tile_rows = 16384
            vmem_limit = 64 * 1024 * 1024
        ncores = 1
        for name in ("num_cores", "tensorcore_count", "num_tensorcores",
                     "cores_per_chip"):
            v = getattr(info, name, None)
            if isinstance(v, int) and v > 0:
                ncores = v
                break
        if ncores >= 2:
            core_splits = 2             # v7x: shard reduction across both TCs
    except Exception:
        pass                            # conservative defaults work everywhere
    return core_splits, tile_rows, vmem_limit


def _make_kernel(rows, tile_rows, chunk_rows, tiles_per_core, last_tile, inv_n,
                 need_row_mask, over_cover):
    """Build the kernel with all static configuration baked in as constants."""
    n_chunks = tile_rows // chunk_rows

    def kernel(pred_ref, tgt_ref, out_ref, acc_sq, acc_abs):
        c = pl.program_id(0)            # core-split index
        j = pl.program_id(1)            # row-tile index within this split
        tile_idx = c * tiles_per_core + j

        @pl.when(j == 0)
        def _():
            acc_sq[c] = jnp.zeros((8, _LANE), jnp.float32)
            acc_abs[c] = jnp.zeros((8, _LANE), jnp.float32)

        def accumulate(masked):
            # Chunked accumulation: bounds in-kernel temporaries to
            # chunk_rows x 128 f32 regardless of tile size.
            def body(kk, carry):
                sq, ab = carry
                r0 = kk * chunk_rows
                if not isinstance(r0, int):
                    r0 = pl.multiple_of(r0, chunk_rows)
                p = pred_ref[pl.ds(r0, chunk_rows), :].astype(jnp.float32)
                t = tgt_ref[pl.ds(r0, chunk_rows), :].astype(jnp.float32)
                d = p - t
                if masked:
                    # Global row index; rows >= `rows` contribute 0.
                    ridx = lax.broadcasted_iota(jnp.int32, d.shape, 0)
                    ridx = ridx + (tile_idx * tile_rows + r0)
                    d = jnp.where(ridx < rows, d, 0.0)
                sq = sq + (d * d).reshape(chunk_rows // 8, 8, _LANE).sum(axis=0)
                ab = ab + jnp.abs(d).reshape(chunk_rows // 8, 8, _LANE).sum(axis=0)
                return sq, ab

            zero = jnp.zeros((8, _LANE), jnp.float32)
            sq, ab = lax.fori_loop(0, n_chunks, body, (zero, zero))
            acc_sq[c] += sq
            acc_abs[c] += ab

        if need_row_mask or over_cover:
            # Full tiles: unmasked fast path. Duplicated (clamped) tiles
            # (tile_idx > last_tile) are skipped entirely.
            full_cond = (tile_idx < last_tile) if need_row_mask \
                else (tile_idx <= last_tile)

            @pl.when(full_cond)
            def _():
                accumulate(masked=False)

            if need_row_mask:
                @pl.when(tile_idx == last_tile)
                def _():
                    accumulate(masked=True)
        else:
            accumulate(masked=False)

        @pl.when(j == pl.num_programs(1) - 1)
        def _():
            # Single fused cross-lane/sublane reduce + weighted combine.
            part = jnp.sum(W_MSE * acc_sq[c] + W_L1 * acc_abs[c]) * inv_n
            out_ref[...] = jnp.full(out_ref.shape, part, dtype=out_ref.dtype)

    return kernel


def combined_loss(pred, target, *, tile_rows=None, core_splits=None,
                  chunk_rows=512):
    """Weighted (MSE, L1) loss over same-shaped inputs, computed in Pallas."""
    assert pred.shape == target.shape
    n_elems = pred.size
    assert n_elems % _LANE == 0, "flattened size must be a multiple of 128 lanes"
    # TODO(synk): fully general shapes need lane-remainder masking as well.
    rows = n_elems // _LANE

    itemsize = jnp.dtype(pred.dtype).itemsize
    sub = {4: 8, 2: 16, 1: 32}.get(itemsize, 8)   # min sublane multiple

    auto_cores, auto_tr, vmem_limit = _tpu_config()
    if core_splits is None:
        core_splits = auto_cores
    if tile_rows is None:
        # Sub-32-bit inputs stream proportionally more rows at the same bytes.
        tile_rows = auto_tr * (4 // itemsize)

    # Chunk / tile rounding (dtype-aware, chunk always divides tile).
    chunk = max(sub, (min(chunk_rows, tile_rows) // sub) * sub)
    if rows <= chunk:
        tr = _round_up(rows, sub)
        chunk = tr
    else:
        tr = min(tile_rows, _round_up(rows, chunk))
        tr = _round_up(tr, chunk)

    nt_total = -(-rows // tr)                         # total row tiles
    core_splits = max(1, min(core_splits, nt_total))  # never split past tiles
    tiles_per_core = -(-nt_total // core_splits)
    grid = (core_splits, tiles_per_core)
    last_tile = nt_total - 1
    over_cover = core_splits * tiles_per_core > nt_total
    need_row_mask = rows != nt_total * tr

    # Input index maps. If the padded tile grid over-covers, clamp the block
    # index so every DMA stays in bounds; duplicated tiles are skipped in-kernel.
    if over_cover:
        def in_map(c, j):
            return (jnp.minimum(c * tiles_per_core + j, last_tile), 0)
    else:
        def in_map(c, j):
            return (c * tiles_per_core + j, 0)

    kernel = _make_kernel(rows, tr, chunk, tiles_per_core, last_tile,
                          1.0 / n_elems, need_row_mask, over_cover)

    if core_splits >= 2:
        dim_sem = (pltpu.CORE_PARALLEL, pltpu.ARBITRARY)
    else:
        dim_sem = (pltpu.ARBITRARY, pltpu.ARBITRARY)

    cost = pl.CostEstimate(
        flops=5 * n_elems,
        transcendentals=0,
        bytes_accessed=2 * n_elems * itemsize + core_splits * 8 * _LANE * 4,
    )

    # One (8,128) output block per core split; each holds that split's partial
    # combined loss (broadcast over the block). Lane-aligned -> unmasked stores.
    out = pl.pallas_call(
        kernel,
        out_shape=jax.ShapeDtypeStruct((core_splits * 8, _LANE), jnp.float32),
        grid_spec=pltpu.PrefetchScalarGridSpec(
            num_scalar_prefetch=0,
            grid=grid,
            in_specs=[
                pl.BlockSpec((tr, _LANE), in_map),
                pl.BlockSpec((tr, _LANE), in_map),
            ],
            out_specs=pl.BlockSpec((8, _LANE), lambda c, j: (c, 0)),
            scratch_shapes=[
                pltpu.VMEM((core_splits, 8, _LANE), jnp.float32),  # acc_sq
                pltpu.VMEM((core_splits, 8, _LANE), jnp.float32),  # acc_abs
            ],
        ),
        compiler_params=pltpu.CompilerParams(
            dimension_semantics=dim_sem,
            vmem_limit_bytes=vmem_limit,
        ),
        cost_estimate=cost,
    )(pred.reshape(rows, _LANE), target.reshape(rows, _LANE))

    # Sum the per-core partial combined losses (linear, so exact).
    return jnp.sum(out[::8, 0])


def combined_loss_ref(pred, target):
    d = pred.astype(jnp.float32) - target.astype(jnp.float32)
    return W_MSE * jnp.mean(d * d) + W_L1 * jnp.mean(jnp.abs(d))


if __name__ == "__main__":
    key = jax.random.PRNGKey(0)
    kp, kt = jax.random.split(key)
    # Small NCHW shapes consistent with a typical regression/segmentation loss.
    B, C, H, W = 2, 4, 16, 16
    pred = jax.random.normal(kp, (B, C, H, W), dtype=jnp.float32)
    target = jax.random.normal(kt, (B, C, H, W), dtype=jnp.float32)

    loss = combined_loss(pred, target)
    loss = jax.block_until_ready(loss)

    ref = combined_loss_ref(pred, target)
    assert jnp.allclose(loss, ref, rtol=1e-5, atol=1e-5), (loss, ref)
    print("KERNEL_OK")
</pallas_src>

<mosaic_0001>
module attributes {stable_mosaic.version = 11 : i64} {
  func.func @kernel(%arg0: i32, %arg1: i32, %arg2: memref<16x128xf32, #tpu.memory_space<vmem>>, %arg3: memref<16x128xf32, #tpu.memory_space<vmem>>, %arg4: memref<8x128xf32, #tpu.memory_space<vmem>>, %arg5: memref<1x8x128xf32, #tpu.memory_space<vmem>>, %arg6: memref<1x8x128xf32, #tpu.memory_space<vmem>>) attributes {dimension_semantics = [#tpu.dimension_semantics<arbitrary>, #tpu.dimension_semantics<arbitrary>], iteration_bounds = array<i64: 1, 1>, scalar_prefetch = 0 : i64, scratch_operands = 2 : i64, tpu.core_type = #tpu.core_type<tc>, window_params = [{transform_indices = @transform_0, window_bounds = array<i64: 16, 128>}, {transform_indices = @transform_1, window_bounds = array<i64: 16, 128>}, {transform_indices = @transform_2, window_bounds = array<i64: 8, 128>}]} {
    %c0_i32 = arith.constant 0 : i32
    %0 = arith.cmpi eq, %arg1, %c0_i32 : i32
    %1 = arith.extui %0 : i1 to i32
    %c0_i32_0 = arith.constant 0 : i32
    %2 = arith.cmpi ne, %1, %c0_i32_0 : i32
    scf.if %2 {
      %cst_15 = arith.constant 0.000000e+00 : f32
      %38 = vector.broadcast %cst_15 : f32 to vector<8x128xf32>
      %39 = arith.index_cast %arg0 : i32 to index
      %c0_16 = arith.constant 0 : index
      %c0_17 = arith.constant 0 : index
      %40 = vector.load %arg5[%39, %c0_16, %c0_17] : memref<1x8x128xf32, #tpu.memory_space<vmem>>, vector<1x8x128xf32>
      %41 = vector.shape_cast %40 : vector<1x8x128xf32> to vector<8x128xf32>
      %42 = vector.shape_cast %38 : vector<8x128xf32> to vector<1x8x128xf32>
      tpu.vector_store %arg5[%39, %c0_16, %c0_17], %42 {strides = array<i32>} : memref<1x8x128xf32, #tpu.memory_space<vmem>>, vector<1x8x128xf32>,
      %cst_18 = arith.constant 0.000000e+00 : f32
      %43 = vector.broadcast %cst_18 : f32 to vector<8x128xf32>
      %44 = arith.index_cast %arg0 : i32 to index
      %c0_19 = arith.constant 0 : index
      %c0_20 = arith.constant 0 : index
      %45 = vector.load %arg6[%44, %c0_19, %c0_20] : memref<1x8x128xf32, #tpu.memory_space<vmem>>, vector<1x8x128xf32>
      %46 = vector.shape_cast %45 : vector<1x8x128xf32> to vector<8x128xf32>
      %47 = vector.shape_cast %43 : vector<8x128xf32> to vector<1x8x128xf32>
      tpu.vector_store %arg6[%44, %c0_19, %c0_20], %47 {strides = array<i32>} : memref<1x8x128xf32, #tpu.memory_space<vmem>>, vector<1x8x128xf32>,
    } else {
    }
    %cst = arith.constant 0.000000e+00 : f32
    %3 = vector.broadcast %cst : f32 to vector<8x128xf32>
    %c0_i32_1 = arith.constant 0 : i32
    %c16_i32 = arith.constant 16 : i32
    %4 = arith.muli %c0_i32_1, %c16_i32 : i32
    %5 = tpu.assume_multiple %4, 16 : i32
    %6 = arith.index_cast %5 : i32 to index
    %c0 = arith.constant 0 : index
    %7 = vector.load %arg2[%6, %c0] : memref<16x128xf32, #tpu.memory_space<vmem>>, vector<16x128xf32>
    %8 = arith.index_cast %5 : i32 to index
    %c0_2 = arith.constant 0 : index
    %9 = vector.load %arg3[%8, %c0_2] : memref<16x128xf32, #tpu.memory_space<vmem>>, vector<16x128xf32>
    %10 = arith.subf %7, %9 : vector<16x128xf32>
    %11 = arith.mulf %10, %10 : vector<16x128xf32>
    %12 = vector.shape_cast %11 : vector<16x128xf32> to vector<2x8x128xf32>
    %cst_3 = arith.constant dense<0.000000e+00> : vector<8x128xf32>
    %13 = vector.multi_reduction <add>, %12, %cst_3 [0] : vector<2x8x128xf32> to vector<8x128xf32>
    %14 = arith.addf %3, %13 : vector<8x128xf32>
    %15 = math.absf %10 : vector<16x128xf32>
    %16 = vector.shape_cast %15 : vector<16x128xf32> to vector<2x8x128xf32>
    %cst_4 = arith.constant dense<0.000000e+00> : vector<8x128xf32>
    %17 = vector.multi_reduction <add>, %16, %cst_4 [0] : vector<2x8x128xf32> to vector<8x128xf32>
    %18 = arith.addf %3, %17 : vector<8x128xf32>
    %c1_i32 = arith.constant 1 : i32
    %19 = arith.index_cast %arg0 : i32 to index
    %c0_5 = arith.constant 0 : index
    %c0_6 = arith.constant 0 : index
    %20 = vector.load %arg5[%19, %c0_5, %c0_6] : memref<1x8x128xf32, #tpu.memory_space<vmem>>, vector<1x8x128xf32>
    %21 = vector.shape_cast %20 : vector<1x8x128xf32> to vector<8x128xf32>
    %22 = arith.addf %21, %14 : vector<8x128xf32>
    %23 = arith.index_cast %arg0 : i32 to index
    %c0_7 = arith.constant 0 : index
    %c0_8 = arith.constant 0 : index
    %24 = vector.load %arg5[%23, %c0_7, %c0_8] : memref<1x8x128xf32, #tpu.memory_space<vmem>>, vector<1x8x128xf32>
    %25 = vector.shape_cast %24 : vector<1x8x128xf32> to vector<8x128xf32>
    %26 = vector.shape_cast %22 : vector<8x128xf32> to vector<1x8x128xf32>
    tpu.vector_store %arg5[%23, %c0_7, %c0_8], %26 {strides = array<i32>} : memref<1x8x128xf32, #tpu.memory_space<vmem>>, vector<1x8x128xf32>,
    %27 = arith.index_cast %arg0 : i32 to index
    %c0_9 = arith.constant 0 : index
    %c0_10 = arith.constant 0 : index
    %28 = vector.load %arg6[%27, %c0_9, %c0_10] : memref<1x8x128xf32, #tpu.memory_space<vmem>>, vector<1x8x128xf32>
    %29 = vector.shape_cast %28 : vector<1x8x128xf32> to vector<8x128xf32>
    %30 = arith.addf %29, %18 : vector<8x128xf32>
    %31 = arith.index_cast %arg0 : i32 to index
    %c0_11 = arith.constant 0 : index
    %c0_12 = arith.constant 0 : index
    %32 = vector.load %arg6[%31, %c0_11, %c0_12] : memref<1x8x128xf32, #tpu.memory_space<vmem>>, vector<1x8x128xf32>
    %33 = vector.shape_cast %32 : vector<1x8x128xf32> to vector<8x128xf32>
    %34 = vector.shape_cast %30 : vector<8x128xf32> to vector<1x8x128xf32>
    tpu.vector_store %arg6[%31, %c0_11, %c0_12], %34 {strides = array<i32>} : memref<1x8x128xf32, #tpu.memory_space<vmem>>, vector<1x8x128xf32>,
    %c0_i32_13 = arith.constant 0 : i32
    %35 = arith.cmpi eq, %arg1, %c0_i32_13 : i32
    %36 = arith.extui %35 : i1 to i32
    %c0_i32_14 = arith.constant 0 : i32
    %37 = arith.cmpi ne, %36, %c0_i32_14 : i32
    scf.if %37 {
      %38 = arith.index_cast %arg0 : i32 to index
      %c0_15 = arith.constant 0 : index
      %c0_16 = arith.constant 0 : index
      %39 = vector.load %arg5[%38, %c0_15, %c0_16] : memref<1x8x128xf32, #tpu.memory_space<vmem>>, vector<1x8x128xf32>
      %40 = vector.shape_cast %39 : vector<1x8x128xf32> to vector<8x128xf32>
      %cst_17 = arith.constant 0.699999988 : f32
      %41 = vector.broadcast %cst_17 : f32 to vector<8x128xf32>
      %42 = arith.mulf %41, %40 : vector<8x128xf32>
      %43 = arith.index_cast %arg0 : i32 to index
      %c0_18 = arith.constant 0 : index
      %c0_19 = arith.constant 0 : index
      %44 = vector.load %arg6[%43, %c0_18, %c0_19] : memref<1x8x128xf32, #tpu.memory_space<vmem>>, vector<1x8x128xf32>
      %45 = vector.shape_cast %44 : vector<1x8x128xf32> to vector<8x128xf32>
      %cst_20 = arith.constant 3.000000e-01 : f32
      %46 = vector.broadcast %cst_20 : f32 to vector<8x128xf32>
      %47 = arith.mulf %46, %45 : vector<8x128xf32>
      %48 = arith.addf %42, %47 : vector<8x128xf32>
      %49 = vector.shape_cast %48 : vector<8x128xf32> to vector<1x8x128xf32>
      %cst_21 = arith.constant dense<0.000000e+00> : vector<1xf32>
      %50 = vector.multi_reduction <add>, %49, %cst_21 [1, 2] : vector<1x8x128xf32> to vector<1xf32>
      %51 = vector.shape_cast %50 : vector<1xf32> to vector<1x1x1xf32>
      %52 = vector.extract %51[0, 0, 0] : f32 from vector<1x1x1xf32>
      %cst_22 = arith.constant 4.8828125E-4 : f32
      %53 = arith.mulf %52, %cst_22 : f32
      %54 = vector.broadcast %53 : f32 to vector<8x128xf32>
      %c0_23 = arith.constant 0 : index
      %c0_24 = arith.constant 0 : index
      %55 = vector.load %arg4[%c0_23, %c0_24] : memref<8x128xf32, #tpu.memory_space<vmem>>, vector<8x128xf32>
      tpu.vector_store %arg4[%c0_23, %c0_24], %54 {strides = array<i32>} : memref<8x128xf32, #tpu.memory_space<vmem>>, vector<8x128xf32>,
    } else {
    }
    return
  }
  func.func @transform_0(%arg0: i32, %arg1: i32) -> (i32, i32) {
    %c1_i32 = arith.constant 1 : i32
    %0 = arith.muli %arg0, %c1_i32 : i32
    %1 = arith.addi %0, %arg1 : i32
    %c0_i32 = arith.constant 0 : i32
    %c0_i32_0 = arith.constant 0 : i32
    return %1, %c0_i32 : i32, i32
  }
  func.func @transform_1(%arg0: i32, %arg1: i32) -> (i32, i32) {
    %c1_i32 = arith.constant 1 : i32
    %0 = arith.muli %arg0, %c1_i32 : i32
    %1 = arith.addi %0, %arg1 : i32
    %c0_i32 = arith.constant 0 : i32
    %c0_i32_0 = arith.constant 0 : i32
    return %1, %c0_i32 : i32, i32
  }
  func.func @transform_2(%arg0: i32, %arg1: i32) -> (i32, i32) {
    %c0_i32 = arith.constant 0 : i32
    %c0_i32_0 = arith.constant 0 : i32
    return %arg0, %c0_i32 : i32, i32
  }
}

</mosaic_0001>

<llo_original>
// kernel: tpu_custom_call.1
$region0: #{tpu_custom_call.1}
  #allocation0 [shape = 'u32[]', space=smem, size = 0x4, offset = 0x4, fixed_abs, tag = 'smem constant byte address 0x4 - core index']
  #allocation1 [shape = 'u32[144,128]{1,0:T(1,128)}', space=vmem, size = 0x12000, scoped, tag = 'internal scratch']
  #allocation2 [shape = 'f32[1,8,128]{2,1,0:T(8,128)}', space=vmem, size = 0x1000, scoped, tag = 'scratch operand']
  #allocation3 [shape = 'f32[1,8,128]{2,1,0:T(8,128)}', space=vmem, size = 0x1000, scoped, tag = 'scratch operand']
  %s0 = inlined_call_operand.hbm [shape: f32[16,128], index: 0, kind: input, shape index: {}]
  %s1 = inlined_call_operand.hbm [shape: f32[16,128], index: 1, kind: input, shape index: {}]
  %s2 = inlined_call_operand.hbm [shape: f32[8,128], index: 2, kind: output, shape index: {}]
  %s3 = sld [smem:[#allocation0]]
  $region34: #{tpu_custom_call.1} parent=0
    _
  %s5 = ssub.s32 1, %s3
  %s6 = scalar_select 0, %s5, %s3
  $region1: #{tpu_custom_call.1} parent=0
    #allocation4 [shape = 'u8[8192]{0}', space=vmem, size = 0x2000, scoped, tag = 'input window, operand 0, single buffered']
    #allocation5 [shape = 's32[1]{0}', space=sflag, size = 0x4, scoped, tag = 'scoped memory for tpu_custom_call.1']
    #allocation6 [shape = 's32[1]{0}', space=sflag, size = 0x4, scoped, tag = 'scoped memory for tpu_custom_call.1']
    #allocation7 [shape = 'u8[8192]{0}', space=vmem, size = 0x2000, scoped, tag = 'input window, operand 1, single buffered']
    #allocation8 [shape = 's32[1]{0}', space=sflag, size = 0x4, scoped, tag = 'scoped memory for tpu_custom_call.1']
    #allocation9 [shape = 'u8[4096]{0}', space=vmem, size = 0x1000, scoped, tag = 'output window, operand 0, single buffered']
    %7 = vsyncpa [#allocation5], 0
    %8 = vsyncpa [#allocation8], 0
    %9 = vsyncpa [#allocation6], 0
    // Predicated region
    $region2: #{tpu_custom_call.1} parent=1 // pred_check
      _
    $region3: #{tpu_custom_call.1} parent=1 // pred_check_branch
      %11 = sbr.rel (0) target = $region5
    $region4: #{tpu_custom_call.1} parent=1 // pred_region
      %s12 = sadd.s32 0, 0
      %s13 = smul.u32 2, %s12
      %s15 = ssub.s32 256, 256
      %16 = vsyncadd [#allocation5], %s15
      %s17 = smul.addr %s13, 128
      %s18 = scalar_lea.hbm %s0, %s17
      %s19 = sshll.u32 [#allocation4], 4
      %s20 = int_to_ptr.vmem [resolvable:$true] %s19
      %25 = dma.hbm_to_vmem [thread:$0]  %s18, 256, %s20, [#allocation5], 128, 128, 8
    $region5: #{tpu_custom_call.1} parent=1 // pred_fallthru
      _
    // Predicated region
    $region6: #{tpu_custom_call.1} parent=1 // pred_check
      _
    $region7: #{tpu_custom_call.1} parent=1 // pred_check_branch
      %27 = sbr.rel (0) target = $region9
    $region8: #{tpu_custom_call.1} parent=1 // pred_region
      %s28 = sadd.s32 0, 0
      %s29 = smul.u32 2, %s28
      %s31 = ssub.s32 256, 256
      %32 = vsyncadd [#allocation8], %s31
      %s33 = smul.addr %s29, 128
      %s34 = scalar_lea.hbm %s1, %s33
      %s35 = sshll.u32 [#allocation7], 4
      %s36 = int_to_ptr.vmem [resolvable:$true] %s35
      %41 = dma.hbm_to_vmem [thread:$0]  %s34, 256, %s36, [#allocation8], 128, 128, 8
    $region9: #{tpu_custom_call.1} parent=1 // pred_fallthru
      _
    // Predicated region
    $region10: #{tpu_custom_call.1} parent=1 // pred_check
      _
    $region11: #{tpu_custom_call.1} parent=1 // pred_check_branch
      %43 = sbr.rel (0) target = $region13
    $region12: #{tpu_custom_call.1} parent=1 // pred_region
      %44 = dma.done [#allocation5], 256
    $region13: #{tpu_custom_call.1} parent=1 // pred_fallthru
      _
    // Predicated region
    $region14: #{tpu_custom_call.1} parent=1 // pred_check
      _
    $region15: #{tpu_custom_call.1} parent=1 // pred_check_branch
      %46 = sbr.rel (0) target = $region17
    $region16: #{tpu_custom_call.1} parent=1 // pred_region
      %47 = dma.done [#allocation8], 256
    $region17: #{tpu_custom_call.1} parent=1 // pred_fallthru
      _
    %s48 = sadd.s32 0, 0
    %s49 = smul.u32 2, %s48
    %s50 = sadd.s32 0, 0
    %s51 = smul.u32 2, %s50
    %p52 = scmp.eq.s32.totalorder 0, 0
    // Predicated region
    $region18: #{tpu_custom_call.1} parent=1 // pred_check
      %p53 = pneg %p52
    $region19: #{tpu_custom_call.1} parent=1 // pred_check_branch
      %55 = sbr.rel (%p53) target = $region21
    $region20: #{tpu_custom_call.1} parent=1 // pred_region
      %s56 = smul.u32 0, 8
      %s57 = scalar_lea.vmem [#allocation2], %s56
      %58 = vst [vmem:[%s57] sm:$0xff] 0.0
      %s59 = scalar_lea.vmem [#allocation3], %s56
      %60 = vst [vmem:[%s59] sm:$0xff] 0.0
    $region21: #{tpu_custom_call.1} parent=1 // pred_fallthru
      _
    %v61 = vld [vmem:[#allocation4] sm:$0xff]
    %v62 = vld [vmem:[#allocation4 + $0x8] sm:$0xff]
    %v63 = vld [vmem:[#allocation7] sm:$0xff]
    %v64 = vld [vmem:[#allocation7 + $0x8] sm:$0xff]
    %v65 = vsub.f32 %v61, %v63
    %v66 = vsub.f32 %v62, %v64
    %v67 = vmul.f32 %v65, %v65
    %v68 = vmul.f32 %v66, %v66
    %v69 = vadd.f32 %v67, %v68
    %v70 = vadd.f32 %v69, 0.0
    %v71 = vand.u32 2147483647, %v65
    %v72 = vand.u32 2147483647, %v66
    %v73 = vadd.f32 %v71, %v72
    %v74 = vadd.f32 %v73, 0.0
    %s75 = smul.u32 0, 8
    %s76 = scalar_lea.vmem [#allocation2], %s75
    %v77 = vld [vmem:[%s76] sm:$0xff]
    %v78 = vadd.f32 %v77, %v70
    %79 = vst [vmem:[%s76] sm:$0xff] %v78
    %s80 = scalar_lea.vmem [#allocation3], %s75
    %v81 = vld [vmem:[%s80] sm:$0xff]
    %v82 = vadd.f32 %v81, %v74
    %83 = vst [vmem:[%s80] sm:$0xff] %v82
    // Predicated region
    $region22: #{tpu_custom_call.1} parent=1 // pred_check
      %p84 = pneg %p52
    $region23: #{tpu_custom_call.1} parent=1 // pred_check_branch
      %86 = sbr.rel (%p84) target = $region25
    $region24: #{tpu_custom_call.1} parent=1 // pred_region
      %v87 = vld [vmem:[%s76] sm:$0xff]
      %v88 = vmul.f32 %v87, 0.7
      %v89 = vld [vmem:[%s80] sm:$0xff]
      %v90 = vmul.f32 %v89, 0.3
      %v91 = vadd.f32 %v88, %v90
      %92 = vadd.xlane.f32.xlu0 %v91
      %v93 = vpop.xlane.xlu0 %92
      %v94 = vrot.slane %v93, 4
      %v95 = vadd.f32 %v93, %v94
      %v96 = vrot.slane %v95, 2
      %v97 = vadd.f32 %v95, %v96
      %v98 = vrot.slane %v97, 1
      %v99 = vadd.f32 %v97, %v98
      %s100 = vtos %v99
      %s101 = smul.f32 %s100, 0.00048828125
      %v102 = vstv %s101
      %103 = vst [vmem:[#allocation9] sm:$0xff] %v102
    $region25: #{tpu_custom_call.1} parent=1 // pred_fallthru
      _
    // Predicated region
    $region26: #{tpu_custom_call.1} parent=1 // pred_check
      _
    $region27: #{tpu_custom_call.1} parent=1 // pred_check_branch
      %105 = sbr.rel (0) target = $region29
    $region28: #{tpu_custom_call.1} parent=1 // pred_region
      %s107 = ssub.s32 128, 128
      %108 = vsyncadd [#allocation6], %s107
      %s110 = sshll.u32 [#allocation9], 4
      %s111 = int_to_ptr.vmem [resolvable:$true] %s110
      %113 = dma.vmem_to_hbm [thread:$0]  %s111, 128, %s2, [#allocation6]
    $region29: #{tpu_custom_call.1} parent=1 // pred_fallthru
      _
    // Predicated region
    $region30: #{tpu_custom_call.1} parent=1 // pred_check
      _
    $region31: #{tpu_custom_call.1} parent=1 // pred_check_branch
      %115 = sbr.rel (0) target = $region33
    $region32: #{tpu_custom_call.1} parent=1 // pred_region
      %116 = dma.done [#allocation6], 128
    $region33: #{tpu_custom_call.1} parent=1 // pred_fallthru
      _
    %117 = vsyncpa [#allocation5], 1
    %118 = vsyncpa [#allocation8], 1
    %119 = vsyncpa [#allocation6], 1

</llo_original>
